<compile_context>
chip_gen: v7x
topology: tpu7x:2x2x1
jax: 0.10.0
libtpu: 0.0.40
codegen_flags: <defaults>
</compile_context>

<pallas_src>
import jax
import jax.numpy as jnp
from jax.experimental import pallas as pl
from jax.experimental.pallas import tpu as pltpu


# ---------------------------------------------------------------------------
# Tiled kernel: grid = (B, N//TN + 1).  Steps 0..T-1 copy x tiles, step T writes
# the gathered prompt row into the first (and only in-bounds) row of the last tile.
# ---------------------------------------------------------------------------
def _task_prompter_tiled_kernel(task_ref,     # scalar-prefetch (SMEM), used by index_maps
                                x_ref,        # (1, TN, D) VMEM
                                prompt_ref,   # (1, 1, D)  VMEM (row for task_id[b])
                                o_ref):       # (1, TN, D) VMEM
    t = pl.program_id(1)
    last = pl.num_programs(1) - 1

    @pl.when(t < last)
    def _copy_x_tile():
        o_ref[...] = x_ref[...]

    @pl.when(t == last)
    def _write_prompt_row():
        # Fill the whole block with the prompt row; only row 0 (global row N) is
        # in-bounds, the rest is clipped by the edge-block writeback.
        o_ref[...] = jnp.broadcast_to(prompt_ref[...], o_ref.shape)


# ---------------------------------------------------------------------------
# Fallback (N not a multiple of 8): one grid step per batch element, blocks equal
# the full array dims so the (8,128) block constraint is trivially satisfied.
# ---------------------------------------------------------------------------
def _task_prompter_whole_kernel(task_ref, x_ref, prompt_ref, o_ref):
    n = x_ref.shape[1]
    o_ref[0, :n, :] = x_ref[0]
    o_ref[0, n:n + 1, :] = prompt_ref[0]


def _pick_seq_tile(n, d, itemsize):
    """Largest multiple-of-8 divisor of N whose pipelined buffers fit a safe VMEM budget.

    In-flight VMEM ~= 2x input tile + 2x output tile (double buffering).  Keep the
    total under ~8 MiB so it fits comfortably inside the conservative default
    scoped-VMEM limit on every chip (v5e/v6e/v7x).  Returns None if N % 8 != 0.
    """
    if n % 8 != 0:
        return None
    budget = 8 * 1024 * 1024
    max_rows = max(8, budget // (4 * d * itemsize))
    tn = min(n, 1024, (max_rows // 8) * 8)
    tn = max(tn, 8)
    while n % tn != 0:        # terminates: 8 divides n
        tn -= 8
    return tn


def task_prompter(x, task_id, prompt):
    """x: (B, N, D), task_id: (B,) int, prompt: (n_tasks, D).  Returns (out, task_id)."""
    B, N, D = x.shape
    n_tasks = prompt.shape[0]
    task_id = task_id.astype(jnp.int32)
    prompt3 = prompt.astype(x.dtype).reshape(n_tasks, 1, D)   # (n_tasks, 1, D)

    itemsize = jnp.dtype(x.dtype).itemsize
    cost = pl.CostEstimate(
        flops=0,
        transcendentals=0,
        bytes_accessed=int(B * N * D * itemsize            # x read
                           + B * D * itemsize              # gathered prompt rows
                           + B * (N + 1) * D * itemsize),  # output write
    )
    out_shape = jax.ShapeDtypeStruct((B, N + 1, D), x.dtype)

    tn = _pick_seq_tile(N, D, itemsize)
    if tn is not None:
        T = N // tn                                          # number of full x tiles
        grid_spec = pltpu.PrefetchScalarGridSpec(
            num_scalar_prefetch=1,
            grid=(B, T + 1),
            in_specs=[
                # x tile; the extra last step re-uses the final tile (clamped index,
                # same block index as the previous step -> Pallas skips the re-DMA).
                pl.BlockSpec((1, tn, D),
                             lambda b, t, tid: (b, jnp.minimum(t, T - 1), 0)),
                # prompt row gathered by task_id[b]; constant across the t axis so it
                # stays resident in VMEM for all sequence tiles of a batch element.
                pl.BlockSpec((1, 1, D), lambda b, t, tid: (tid[b], 0, 0)),
            ],
            out_specs=pl.BlockSpec((1, tn, D), lambda b, t, tid: (b, t, 0)),
        )
        out = pl.pallas_call(
            _task_prompter_tiled_kernel,
            out_shape=out_shape,
            grid_spec=grid_spec,
            compiler_params=pltpu.CompilerParams(
                dimension_semantics=("parallel", "parallel")),
            cost_estimate=cost,
        )(task_id, x, prompt3)
    else:
        # TODO(synk): sequences with N % 8 != 0 fall back to a whole-slab copy per
        # batch element (full-dim blocks), which is correct but not N-tiled.
        grid_spec = pltpu.PrefetchScalarGridSpec(
            num_scalar_prefetch=1,
            grid=(B,),
            in_specs=[
                pl.BlockSpec((1, N, D), lambda b, tid: (b, 0, 0)),
                pl.BlockSpec((1, 1, D), lambda b, tid: (tid[b], 0, 0)),
            ],
            out_specs=pl.BlockSpec((1, N + 1, D), lambda b, tid: (b, 0, 0)),
        )
        out = pl.pallas_call(
            _task_prompter_whole_kernel,
            out_shape=out_shape,
            grid_spec=grid_spec,
            compiler_params=pltpu.CompilerParams(dimension_semantics=("parallel",)),
            cost_estimate=cost,
        )(task_id, x, prompt3)

    # task_id is returned unchanged (pass-through in the PyTorch forward).
    return out, task_id


def _reference(x, task_id, prompt):
    return jnp.concatenate([x, prompt[task_id][:, None, :]], axis=1)


if __name__ == "__main__":
    B, N, D = 2, 16, 128          # D multiple of 128 -> lane-dense output stores
    N_TASKS = 3

    key = jax.random.PRNGKey(0)
    kx, kt, kp = jax.random.split(key, 3)

    x = jax.random.normal(kx, (B, N, D), dtype=jnp.float32)
    task_id = jax.random.randint(kt, (B,), 0, N_TASKS, dtype=jnp.int32)
    # nn.Parameter initialized with uniform_(-1, 1)
    prompt = jax.random.uniform(kp, (N_TASKS, D), dtype=jnp.float32,
                                minval=-1.0, maxval=1.0)

    out, tid_out = task_prompter(x, task_id, prompt)
    out = jax.block_until_ready(out)

    ref = _reference(x, task_id, prompt)
    assert out.shape == (B, N + 1, D)
    assert jnp.array_equal(tid_out, task_id)
    assert jnp.allclose(out, ref, atol=0.0, rtol=0.0), "mismatch vs reference"

    print("KERNEL_OK")
</pallas_src>

<mosaic_0001>
module attributes {stable_mosaic.version = 11 : i64} {
  func.func @_task_prompter_tiled_kernel(%arg0: i32, %arg1: i32, %arg2: memref<2xi32, #tpu.memory_space<smem>>, %arg3: memref<1x16x128xf32, #tpu.memory_space<vmem>>, %arg4: memref<1x1x128xf32, #tpu.memory_space<vmem>>, %arg5: memref<1x16x128xf32, #tpu.memory_space<vmem>>) attributes {dimension_semantics = [#tpu.dimension_semantics<parallel>, #tpu.dimension_semantics<parallel>], iteration_bounds = array<i64: 2, 2>, scalar_prefetch = 1 : i64, scratch_operands = 0 : i64, tpu.core_type = #tpu.core_type<tc>, window_params = [{transform_indices = @transform_0, window_bounds = array<i64: 1, 16, 128>}, {transform_indices = @transform_1, window_bounds = array<i64: 1, 1, 128>}, {transform_indices = @transform_2, window_bounds = array<i64: 1, 16, 128>}]} {
    %c1_i32 = arith.constant 1 : i32
    %0 = arith.cmpi slt, %arg1, %c1_i32 : i32
    %1 = arith.extui %0 : i1 to i32
    %c0_i32 = arith.constant 0 : i32
    %2 = arith.cmpi ne, %1, %c0_i32 : i32
    scf.if %2 {
      %c0 = arith.constant 0 : index
      %c0_2 = arith.constant 0 : index
      %c0_3 = arith.constant 0 : index
      %6 = vector.load %arg3[%c0, %c0_2, %c0_3] : memref<1x16x128xf32, #tpu.memory_space<vmem>>, vector<1x16x128xf32>
      %c0_4 = arith.constant 0 : index
      %c0_5 = arith.constant 0 : index
      %c0_6 = arith.constant 0 : index
      %7 = vector.load %arg5[%c0_4, %c0_5, %c0_6] : memref<1x16x128xf32, #tpu.memory_space<vmem>>, vector<1x16x128xf32>
      tpu.vector_store %arg5[%c0_4, %c0_5, %c0_6], %6 {strides = array<i32>} : memref<1x16x128xf32, #tpu.memory_space<vmem>>, vector<1x16x128xf32>,
    } else {
    }
    %c1_i32_0 = arith.constant 1 : i32
    %3 = arith.cmpi eq, %arg1, %c1_i32_0 : i32
    %4 = arith.extui %3 : i1 to i32
    %c0_i32_1 = arith.constant 0 : i32
    %5 = arith.cmpi ne, %4, %c0_i32_1 : i32
    scf.if %5 {
      %c0 = arith.constant 0 : index
      %c0_2 = arith.constant 0 : index
      %c0_3 = arith.constant 0 : index
      %6 = vector.load %arg4[%c0, %c0_2, %c0_3] : memref<1x1x128xf32, #tpu.memory_space<vmem>>, vector<1x1x128xf32>
      %7 = vector.shape_cast %6 : vector<1x1x128xf32> to vector<1x1x128xf32>
      %8 = vector.broadcast %7 : vector<1x1x128xf32> to vector<1x16x128xf32>
      %c0_4 = arith.constant 0 : index
      %c0_5 = arith.constant 0 : index
      %c0_6 = arith.constant 0 : index
      %9 = vector.load %arg5[%c0_4, %c0_5, %c0_6] : memref<1x16x128xf32, #tpu.memory_space<vmem>>, vector<1x16x128xf32>
      tpu.vector_store %arg5[%c0_4, %c0_5, %c0_6], %8 {strides = array<i32>} : memref<1x16x128xf32, #tpu.memory_space<vmem>>, vector<1x16x128xf32>,
    } else {
    }
    return
  }
  func.func @transform_0(%arg0: i32, %arg1: i32, %arg2: memref<2xi32, #tpu.memory_space<smem>>) -> (i32, i32, i32) {
    %c0_i32 = arith.constant 0 : i32
    %0 = arith.minsi %arg1, %c0_i32 : i32
    %c0_i32_0 = arith.constant 0 : i32
    %c0_i32_1 = arith.constant 0 : i32
    return %arg0, %0, %c0_i32_0 : i32, i32, i32
  }
  func.func @transform_1(%arg0: i32, %arg1: i32, %arg2: memref<2xi32, #tpu.memory_space<smem>>) -> (i32, i32, i32) {
    %0 = arith.index_cast %arg0 : i32 to index
    %1 = memref.load %arg2[%0] : memref<2xi32, #tpu.memory_space<smem>>
    %c0_i32 = arith.constant 0 : i32
    %c0_i32_0 = arith.constant 0 : i32
    %c0_i32_1 = arith.constant 0 : i32
    return %1, %c0_i32, %c0_i32_0 : i32, i32, i32
  }
  func.func @transform_2(%arg0: i32, %arg1: i32, %arg2: memref<2xi32, #tpu.memory_space<smem>>) -> (i32, i32, i32) {
    %c0_i32 = arith.constant 0 : i32
    %c0_i32_0 = arith.constant 0 : i32
    return %arg0, %arg1, %c0_i32 : i32, i32, i32
  }
}

</mosaic_0001>

<llo_original>
// kernel: tpu_custom_call.1
$region0: #{tpu_custom_call.1}
  #allocation0 [shape = 'u32[]', space=smem, size = 0x4, offset = 0x4, fixed_abs, tag = 'smem constant byte address 0x4 - core index']
  #allocation1 [shape = 'u32[144,128]{1,0:T(1,128)}', space=vmem, size = 0x12000, scoped, tag = 'internal scratch']
  #allocation2 [shape = 's32[1]{0}', space=sflag, size = 0x4, scoped, tag = 'scoped memory for tpu_custom_call.1']
  #allocation3 [shape = 'u8[512]{0}', space=smem, size = 0x200, scoped, tag = 'prefetched SMEM operand 0']
  %s0 = inlined_call_operand.hbm [shape: s32[2], index: 0, kind: input, shape index: {}]
  %s1 = inlined_call_operand.hbm [shape: f32[2,16,128], index: 1, kind: input, shape index: {}]
  %s2 = inlined_call_operand.vmem [shape: f32[3,1,128], index: 2, kind: input, shape index: {}]
  %s3 = inlined_call_operand.vmem [shape: f32[2,17,128], index: 3, kind: output, shape index: {}]
  %s4 = sld [smem:[#allocation0]]
  $region101: #{tpu_custom_call.1} parent=0
    _
  %s6 = ssub.s32 1, %s4
  %s7 = scalar_select 0, %s6, %s4
  %9 = dma.hbm_to_smem %s0, 16, [#allocation3], [#allocation2]
  %10 = dma.done [#allocation2], 16
  %11 = sfence
  $region1: #{tpu_custom_call.1} parent=0
    #allocation4 [shape = 'u8[16384]{0}', space=vmem, size = 0x4000, scoped, tag = 'input window, operand 1']
    #allocation5 [shape = 's32[2]{0}', space=sflag, size = 0x8, scoped, tag = 'scoped memory for tpu_custom_call.1']
    #allocation6 [shape = 'u8[16384]{0}', space=vmem, size = 0x4000, scoped, tag = 'output window, operand 0']
    %12 = vsyncpa [#allocation5], 0
    %s13 = scalar_lea.sflag [#allocation5], 1
    %14 = vsyncpa %s13, 0
    loop: start=0, step=1, limit=6
    $region2: #{tpu_custom_call.1} parent=1 // loop_pre_header
      _
    $region3: #{tpu_custom_call.1} parent=1 // loop_header
      %s16 = sphi 0, %s20
      %p17 = scmp.ge.s32.totalorder %s16, 6
      %s23 = sphi 0, %s35
      %s24 = sphi 0, %s31
      %s25 = sphi 0, %s23
      %s26 = sphi 0, %s24
      %s27 = sphi 0, %s25
      %s28 = sphi 0, %s26
      %s44 = sphi 0, %s46
      %s47 = sphi 0, %s44
      %s48 = sphi 0, %s47
      %s64 = sphi 0, %s48
      %s72 = sphi 0, %s74
      %s75 = sphi 0, %s72
      %s76 = sphi 0, %s75
      %s92 = sphi 0, %s76
      %s100 = sphi 0, %s102
      %s103 = sphi 0, %s100
      %s104 = sphi 0, %s103
      %s120 = sphi 0, %s104
    $region4: #{tpu_custom_call.1} parent=1 // loop_header_branch
      %19 = sbr.rel (%p17) target = $region8
    $region5: #{tpu_custom_call.1} parent=1 // loop_body
      %s21 = ssub.s32 %s16, 1
      %s22 = ssub.s32 %s16, 2
      %s29 = sadd.s32 1, %s24
      %p30 = scmp.ge.s32.totalorder %s29, 2
      %s31 = scalar_select %p30, 0, %s29
      %s32 = sadd.s32 1, %s23
      %s33 = scalar_select %p30, %s32, %s23
      %p34 = scmp.ge.s32.totalorder %s33, 2
      %s35 = scalar_select %p34, 0, %s33
      %p36 = scmp.lt.s32.totalorder %s24, 0
      %s37 = scalar_select %p36, %s24, 0
      %p38 = scmp.lt.s32.totalorder %s31, 0
      %s39 = scalar_select %p38, %s31, 0
      %s40 = ssub.s32 %s23, %s35
      %s41 = ssub.s32 %s37, %s39
      %s42 = sor.u32 %s40, %s41
      %p43 = scmp.eq.s32.totalorder %s42, 0
      %s45 = sadd.s32 %s44, 1
      %s46 = scalar_select %p43, %s44, %s45
      %p49 = pneg %p43
      %p50 = scmp.eq.s32.totalorder %s16, 3
      %p51 = por %p49, %p50
      %p52 = scmp.ne.s32.totalorder %s44, %s47
      %p53 = scmp.eq.s32.totalorder %s16, 0
      %p54 = por %p52, %p53
      %p55 = scmp.ne.s32.totalorder %s44, %s47
      %p56 = scmp.eq.s32.totalorder %s21, 3
      %p57 = por %p55, %p56
      %p58 = scmp.ne.s32.totalorder %s47, %s48
      %p59 = scmp.eq.s32.totalorder %s21, 0
      %p60 = por %p58, %p59
      %p61 = scmp.ne.s32.totalorder %s47, %s48
      %p62 = scmp.eq.s32.totalorder %s22, 3
      %p63 = por %p61, %p62
      %p65 = scmp.ne.s32.totalorder %s48, %s64
      %p66 = scmp.eq.s32.totalorder %s22, 0
      %p67 = por %p65, %p66
      %s68 = sld [smem:[#allocation3 + %s23]]
      %s69 = sld [smem:[#allocation3 + %s35]]
      %s70 = ssub.s32 %s68, %s69
      %p71 = scmp.eq.s32.totalorder %s70, 0
      %s73 = sadd.s32 %s72, 1
      %s74 = scalar_select %p71, %s72, %s73
      %p77 = pneg %p71
      %p78 = scmp.eq.s32.totalorder %s16, 3
      %p79 = por %p77, %p78
      %p80 = scmp.ne.s32.totalorder %s72, %s75
      %p81 = scmp.eq.s32.totalorder %s16, 0
      %p82 = por %p80, %p81
      %p83 = scmp.ne.s32.totalorder %s72, %s75
      %p84 = scmp.eq.s32.totalorder %s21, 3
      %p85 = por %p83, %p84
      %p86 = scmp.ne.s32.totalorder %s75, %s76
      %p87 = scmp.eq.s32.totalorder %s21, 0
      %p88 = por %p86, %p87
      %p89 = scmp.ne.s32.totalorder %s75, %s76
      %p90 = scmp.eq.s32.totalorder %s22, 3
      %p91 = por %p89, %p90
      %p93 = scmp.ne.s32.totalorder %s76, %s92
      %p94 = scmp.eq.s32.totalorder %s22, 0
      %p95 = por %p93, %p94
      %s96 = ssub.s32 %s23, %s35
      %s97 = ssub.s32 %s24, %s31
      %s98 = sor.u32 %s96, %s97
      %p99 = scmp.eq.s32.totalorder %s98, 0
      %s101 = sadd.s32 %s100, 1
      %s102 = scalar_select %p99, %s100, %s101
      %p105 = pneg %p99
      %p106 = scmp.eq.s32.totalorder %s16, 3
      %p107 = por %p105, %p106
      %p108 = scmp.ne.s32.totalorder %s100, %s103
      %p109 = scmp.eq.s32.totalorder %s16, 0
      %p110 = por %p108, %p109
      %p111 = scmp.ne.s32.totalorder %s100, %s103
      %p112 = scmp.eq.s32.totalorder %s21, 3
      %p113 = por %p111, %p112
      %p114 = scmp.ne.s32.totalorder %s103, %s104
      %p115 = scmp.eq.s32.totalorder %s21, 0
      %p116 = por %p114, %p115
      %p117 = scmp.ne.s32.totalorder %s103, %s104
      %p118 = scmp.eq.s32.totalorder %s22, 3
      %p119 = por %p117, %p118
      %p121 = scmp.ne.s32.totalorder %s104, %s120
      %p122 = scmp.eq.s32.totalorder %s22, 0
      %p123 = por %p121, %p122
      %p124 = scmp.le.s32.totalorder 1, %s16
      %p125 = scmp.lt.s32.totalorder %s16, 5
      %p126 = pnand %p124, %p125
      %p127 = pneg %p126
      // Predicated region
      $region9: #{tpu_custom_call.1} parent=5 // pred_check
        _
      $region10: #{tpu_custom_call.1} parent=5 // pred_check_branch
        %129 = sbr.rel (%p126) target = $region12
      $region11: #{tpu_custom_call.1} parent=5 // pred_region
        %s130 = ssub.s32 %s16, 1
      $region12: #{tpu_custom_call.1} parent=5 // pred_fallthru
        _
      %p131 = scmp.lt.s32.totalorder %s16, 4
      // Predicated region
      $region13: #{tpu_custom_call.1} parent=5 // pred_check
        %p132 = pneg %p131
      $region14: #{tpu_custom_call.1} parent=5 // pred_check_branch
        %134 = sbr.rel (%p132) target = $region16
      $region15: #{tpu_custom_call.1} parent=5 // pred_region
        // Predicated region
        $region17: #{tpu_custom_call.1} parent=15 // pred_check
          %p135 = pneg %p54
        $region18: #{tpu_custom_call.1} parent=15 // pred_check_branch
          %137 = sbr.rel (%p135) target = $region20
        $region19: #{tpu_custom_call.1} parent=15 // pred_region
          %s138 = sand.u32 %s44, 1
          %s139 = scalar_lea.sflag [#allocation5], %s138
          %s140 = sand.u32 %s44, 1
          %s141 = smul.addr %s140, 16
          %s142 = scalar_lea.vmem [#allocation4], %s141
          %p143 = scmp.lt.s32.totalorder %s24, 0
          %s144 = scalar_select %p143, %s24, 0
          %s145 = smul.u32 2, %s144
          %s147 = ssub.s32 256, 256
          %148 = vsyncadd %s139, %s147
          %s149 = smul.addr %s23, 2
          %s150 = sadd.s32 %s145, %s149
          %s151 = smul.addr %s150, 128
          %s152 = scalar_lea.hbm %s1, %s151
          %s153 = sshll.u32 %s142, 4
          %s154 = int_to_ptr.vmem [resolvable:$true] %s153
          %159 = dma.hbm_to_vmem [thread:$0]  %s152, 256, %s154, %s139, 128, 128, 8
        $region20: #{tpu_custom_call.1} parent=15 // pred_fallthru
          _
        // Predicated region
        $region21: #{tpu_custom_call.1} parent=15 // pred_check
          %p160 = pneg %p82
        $region22: #{tpu_custom_call.1} parent=15 // pred_check_branch
          %162 = sbr.rel (%p160) target = $region24
        $region23: #{tpu_custom_call.1} parent=15 // pred_region
          %s163 = sld [smem:[#allocation3 + %s23]]
          %p164 = scmp.lt.s32.totalorder %s163, 2
          %s165 = scalar_select %p164, %s163, 2
          %s166 = scalar_lea.vmem %s2, %s165
          %s167 = sld [smem:[#allocation3 + %s23]]
        $region24: #{tpu_custom_call.1} parent=15 // pred_fallthru
          _
      $region16: #{tpu_custom_call.1} parent=5 // pred_fallthru
        _
      %p168 = scmp.le.s32.totalorder 1, %s16
      %p169 = scmp.lt.s32.totalorder %s16, 5
      %p170 = pnand %p168, %p169
      %p171 = pneg %p170
      // Predicated region
      $region25: #{tpu_custom_call.1} parent=5 // pred_check
        _
      $region26: #{tpu_custom_call.1} parent=5 // pred_check_branch
        %173 = sbr.rel (%p170) target = $region28
      $region27: #{tpu_custom_call.1} parent=5 // pred_region
        %s174 = ssub.s32 %s16, 1
        %s175 = sand.u32 %s47, 1
        %s176 = scalar_lea.sflag [#allocation5], %s175
        %s177 = sand.u32 %s47, 1
        %s178 = smul.addr %s177, 16
        %s179 = scalar_lea.vmem [#allocation4], %s178
        // Predicated region
        $region29: #{tpu_custom_call.1} parent=27 // pred_check
          %p180 = pneg %p60
        $region30: #{tpu_custom_call.1} parent=27 // pred_check_branch
          %182 = sbr.rel (%p180) target = $region32
        $region31: #{tpu_custom_call.1} parent=27 // pred_region
          %183 = dma.done %s176, 256
        $region32: #{tpu_custom_call.1} parent=27 // pred_fallthru
          _
        %s184 = sand.u32 %s47, 1
        %s185 = scalar_lea.sflag [#allocation5], %s184
        %s186 = sand.u32 %s47, 1
        %s187 = smul.addr %s186, 16
        %s188 = scalar_lea.vmem [#allocation4], %s187
        %p189 = pneg %p60
        %p190 = pneg %p57
        %s191 = sld [smem:[#allocation3 + %s25]]
        %p192 = scmp.lt.s32.totalorder %s191, 2
        %s193 = scalar_select %p192, %s191, 2
        %s194 = scalar_lea.vmem %s2, %s193
        %p195 = pneg %p88
        %p196 = pneg %p85
        %p197 = pneg %p116
        %p198 = pneg %p113
        %s199 = sand.u32 %s103, 1
        %s200 = sand.u32 %s103, 1
        %s201 = smul.addr %s200, 16
        %s202 = scalar_lea.vmem [#allocation6], %s201
        %p203 = scmp.lt.s32.totalorder %s26, 0
        %s204 = scalar_select %p203, %s26, 0
        %s205 = smul.u32 2, %s204
        %s206 = sld [smem:[#allocation3 + %s25]]
        %p207 = scmp.lt.s32.totalorder %s206, 2
        %s208 = scalar_select %p207, %s206, 2
        %s209 = scalar_lea.vmem %s2, %s208
        %s210 = sld [smem:[#allocation3 + %s25]]
        %s211 = smul.u32 2, %s26
        %s212 = ssub.s32 3, %s211
        %p213 = scmp.lt.s32.totalorder %s212, 2
        %s214 = scalar_select %p213, %s212, 2
        %s215 = smul.u32 128, %s214
        %p216 = scmp.lt.s32.totalorder %s26, 1
        // Predicated region
        $region33: #{tpu_custom_call.1} parent=27 // pred_check
          %p217 = pneg %p216
        $region34: #{tpu_custom_call.1} parent=27 // pred_check_branch
          %219 = sbr.rel (%p217) target = $region36
        $region35: #{tpu_custom_call.1} parent=27 // pred_region
          %v220 = vld [vmem:[%s179] sm:$0xff]
          %v221 = vld [vmem:[%s179 + $0x8] sm:$0xff]
          %222 = vst [vmem:[%s202] sm:$0xff] %v220
          %223 = vst [vmem:[%s202 + $0x8] sm:$0xff] %v221
        $region36: #{tpu_custom_call.1} parent=27 // pred_fallthru
          _
        %p224 = scmp.eq.s32.totalorder %s26, 1
        // Predicated region
        $region37: #{tpu_custom_call.1} parent=27 // pred_check
          %p225 = pneg %p224
        $region38: #{tpu_custom_call.1} parent=27 // pred_check_branch
          %227 = sbr.rel (%p225) target = $region40
        $region39: #{tpu_custom_call.1} parent=27 // pred_region
          %v228 = vld [vmem:[%s209] sm:$0x1]
          %v230 = vlaneseq
          %v231 = vshrl.u32 %v230, 7
          %v232 = vsub.s32 0, %v231
          %v233 = vrot.slane %v228, %v232
          %235 = vst [vmem:[%s202] sm:$0xff] %v233
          %236 = vst [vmem:[%s202 + $0x8] sm:$0xff] %v233
        $region40: #{tpu_custom_call.1} parent=27 // pred_fallthru
          _
        %s237 = sand.u32 %s103, 1
        %s238 = sand.u32 %s103, 1
        %s239 = smul.addr %s238, 16
        %s240 = scalar_lea.vmem [#allocation6], %s239
        // Predicated region
        $region41: #{tpu_custom_call.1} parent=27 // pred_check
          %p241 = pneg %p113
        $region42: #{tpu_custom_call.1} parent=27 // pred_check_branch
          %243 = sbr.rel (%p241) target = $region44
        $region43: #{tpu_custom_call.1} parent=27 // pred_region
          %s244 = smul.u32 2, %s26
          %s245 = ssub.s32 3, %s244
          %p246 = scmp.lt.s32.totalorder %s245, 2
          %s247 = scalar_select %p246, %s245, 2
          %s248 = smul.u32 128, %s247
          %p249 = scmp.ne.s32.totalorder 0, %s248
          %s250 = smul.addr %s25, 3
          %s251 = sadd.s32 %s244, %s250
          %s252 = smul.addr %s251, 8
          %s253 = scalar_lea.vmem %s3, %s252
          // Predicated region
          $region45: #{tpu_custom_call.1} parent=43 // pred_check
            %p254 = pneg %p249
          $region46: #{tpu_custom_call.1} parent=43 // pred_check_branch
            %256 = sbr.rel (%p254) target = $region48
          $region47: #{tpu_custom_call.1} parent=43 // pred_region
            // Predicated region
            $region49: #{tpu_custom_call.1} parent=47 // pred_check
              _
            $region50: #{tpu_custom_call.1} parent=47 // pred_check_branch
              %258 = sbr.rel (0) target = $region52
            $region51: #{tpu_custom_call.1} parent=47 // pred_region
              // Predicated region
              $region71: #{tpu_custom_call.1} parent=51 // pred_check
                _
              $region72: #{tpu_custom_call.1} parent=51 // pred_check_branch
                %309 = sbr.rel (0) target = $region74
              $region73: #{tpu_custom_call.1} parent=51 // pred_region
                %s310 = sshrl.u32 %s247, 1
                // While loop
                $region75: #{tpu_custom_call.1} parent=73 // loop_pre_header
                  _
                $region76: #{tpu_custom_call.1} parent=73 // loop_header
                  %s312 = sphi 0, %s314
                  %p313 = scmp.ge.s32.totalorder %s312, %s310
                  %s317 = sphi 0, %s326
                  %s318 = sphi %s240, %s329
                  %s319 = sphi %s253, %s330
                $region77: #{tpu_custom_call.1} parent=73 // loop_header_branch
                  %316 = sbr.rel (%p313) target = $region81
                $region78: #{tpu_custom_call.1} parent=73 // loop_body
                  %v320 = vld [vmem:[%s318] sm:$0xff]
                  %321 = vst [vmem:[%s319] sm:$0xff] %v320
                  %v322 = vld [vmem:[%s318 + $0x8] sm:$0xff]
                  %323 = vst [vmem:[%s319 + $0x8] sm:$0xff] %v322
                  %s324 = sadd.s32 1, %s317
                  %p325 = scmp.ge.s32.totalorder %s324, %s310
                  %s326 = scalar_select %p325, 0, %s324
                  %s327 = smul.u32 %s326, 16
                  %s328 = smul.u32 %s326, 16
                  %s329 = scalar_lea.vmem %s240, %s327 [#allocation6]
                  %s330 = scalar_lea.vmem %s253, %s328
                $region79: #{tpu_custom_call.1} parent=73 // loop_footer
                  %s314 = sadd.s32 %s312, 1
                $region80: #{tpu_custom_call.1} parent=73 // loop_footer_branch
                  %311 = sbr.rel target = $region76
                $region81: #{tpu_custom_call.1} parent=73 // loop_exit
                  _
                %s331 = sshrl.u32 %s247, 1
                %s332 = sand.u32 %s247, 1
                %s333 = smul.u32 %s331, 2
                %s334 = smul.u32 8, %s333
                %s335 = scalar_lea.vmem %s240, %s334 [#allocation6]
                %s336 = smul.u32 8, %s333
                %s337 = scalar_lea.vmem %s253, %s336
                // While loop
                $region82: #{tpu_custom_call.1} parent=73 // loop_pre_header
                  _
                $region83: #{tpu_custom_call.1} parent=73 // loop_header
                  %s339 = sphi 0, %s341
                  %p340 = scmp.ge.s32.totalorder %s339, %s332
                  %s344 = sphi 0, %s351
                  %s345 = sphi %s335, %s354
                  %s346 = sphi %s337, %s355
                $region84: #{tpu_custom_call.1} parent=73 // loop_header_branch
                  %343 = sbr.rel (%p340) target = $region88
                $region85: #{tpu_custom_call.1} parent=73 // loop_body
                  %v347 = vld [vmem:[%s345] sm:$0xff]
                  %348 = vst [vmem:[%s346] sm:$0xff] %v347
                  %s349 = sadd.s32 1, %s344
                  %p350 = scmp.ge.s32.totalorder %s349, %s332
                  %s351 = scalar_select %p350, 0, %s349
                  %s352 = smul.u32 %s351, 8
                  %s353 = smul.u32 %s351, 8
                  %s354 = scalar_lea.vmem %s335, %s352 [#allocation6]
                  %s355 = scalar_lea.vmem %s337, %s353
                $region86: #{tpu_custom_call.1} parent=73 // loop_footer
                  %s341 = sadd.s32 %s339, 1
                $region87: #{tpu_custom_call.1} parent=73 // loop_footer_branch
                  %338 = sbr.rel target = $region83
                $region88: #{tpu_custom_call.1} parent=73 // loop_exit
                  _
              $region74: #{tpu_custom_call.1} parent=51 // pred_fallthru
                _
              // Predicated region
              $region89: #{tpu_custom_call.1} parent=51 // pred_check
                _
              $region90: #{tpu_custom_call.1} parent=51 // pred_check_branch
                %357 = sbr.rel target = $region92
              $region91: #{tpu_custom_call.1} parent=51 // pred_region
                _
              $region92: #{tpu_custom_call.1} parent=51 // pred_fallthru
                _
            $region52: #{tpu_custom_call.1} parent=47 // pred_fallthru
              _
            // Predicated region
            $region53: #{tpu_custom_call.1} parent=47 // pred_check
              _
            $region54: #{tpu_custom_call.1} parent=47 // pred_check_branch
              %260 = sbr.rel target = $region56
            $region55: #{tpu_custom_call.1} parent=47 // pred_region
              %s262 = sshrl.u32 %s247, 1
              // While loop
              $region57: #{tpu_custom_call.1} parent=55 // loop_pre_header
                _
              $region58: #{tpu_custom_call.1} parent=55 // loop_header
                %s264 = sphi 0, %s266
                %p265 = scmp.ge.s32.totalorder %s264, %s262
                %s269 = sphi 0, %s278
                %s270 = sphi %s240, %s281
                %s271 = sphi %s253, %s282
              $region59: #{tpu_custom_call.1} parent=55 // loop_header_branch
                %268 = sbr.rel (%p265) target = $region63
              $region60: #{tpu_custom_call.1} parent=55 // loop_body
                %v272 = vld [vmem:[%s270] sm:$0xff]
                %273 = vst [vmem:[%s271] sm:$0xff] %v272
                %v274 = vld [vmem:[%s270 + $0x8] sm:$0xff]
                %275 = vst [vmem:[%s271 + $0x8] sm:$0xff] %v274
                %s276 = sadd.s32 1, %s269
                %p277 = scmp.ge.s32.totalorder %s276, %s262
                %s278 = scalar_select %p277, 0, %s276
                %s279 = smul.u32 %s278, 16
                %s280 = smul.u32 %s278, 16
                %s281 = scalar_lea.vmem %s240, %s279 [#allocation6]
                %s282 = scalar_lea.vmem %s253, %s280
              $region61: #{tpu_custom_call.1} parent=55 // loop_footer
                %s266 = sadd.s32 %s264, 1
              $region62: #{tpu_custom_call.1} parent=55 // loop_footer_branch
                %263 = sbr.rel target = $region58
              $region63: #{tpu_custom_call.1} parent=55 // loop_exit
                _
              %s283 = sshrl.u32 %s247, 1
              %s284 = sand.u32 %s247, 1
              %s285 = smul.u32 %s283, 2
              %s286 = smul.u32 8, %s285
              %s287 = scalar_lea.vmem %s240, %s286 [#allocation6]
              %s288 = smul.u32 8, %s285
              %s289 = scalar_lea.vmem %s253, %s288
              // While loop
              $region64: #{tpu_custom_call.1} parent=55 // loop_pre_header
                _
              $region65: #{tpu_custom_call.1} parent=55 // loop_header
                %s291 = sphi 0, %s293
                %p292 = scmp.ge.s32.totalorder %s291, %s284
                %s296 = sphi 0, %s303
                %s297 = sphi %s287, %s306
                %s298 = sphi %s289, %s307
              $region66: #{tpu_custom_call.1} parent=55 // loop_header_branch
                %295 = sbr.rel (%p292) target = $region70
              $region67: #{tpu_custom_call.1} parent=55 // loop_body
                %v299 = vld [vmem:[%s297] sm:$0xff]
                %300 = vst [vmem:[%s298] sm:$0xff] %v299
                %s301 = sadd.s32 1, %s296
                %p302 = scmp.ge.s32.totalorder %s301, %s284
                %s303 = scalar_select %p302, 0, %s301
                %s304 = smul.u32 %s303, 8
                %s305 = smul.u32 %s303, 8
                %s306 = scalar_lea.vmem %s287, %s304 [#allocation6]
                %s307 = scalar_lea.vmem %s289, %s305
              $region68: #{tpu_custom_call.1} parent=55 // loop_footer
                %s293 = sadd.s32 %s291, 1
              $region69: #{tpu_custom_call.1} parent=55 // loop_footer_branch
                %290 = sbr.rel target = $region65
              $region70: #{tpu_custom_call.1} parent=55 // loop_exit
                _
            $region56: #{tpu_custom_call.1} parent=47 // pred_fallthru
              _
          $region48: #{tpu_custom_call.1} parent=43 // pred_fallthru
            _
          %358 = vnop
        $region44: #{tpu_custom_call.1} parent=27 // pred_fallthru
          _
      $region28: #{tpu_custom_call.1} parent=5 // pred_fallthru
        _
      %p359 = scmp.le.s32.totalorder 2, %s16
      // Predicated region
      $region93: #{tpu_custom_call.1} parent=5 // pred_check
        %p360 = pneg %p359
      $region94: #{tpu_custom_call.1} parent=5 // pred_check_branch
        %362 = sbr.rel (%p360) target = $region96
      $region95: #{tpu_custom_call.1} parent=5 // pred_region
        %s363 = ssub.s32 %s16, 2
        // Predicated region
        $region97: #{tpu_custom_call.1} parent=95 // pred_check
          %p364 = pneg %p119
        $region98: #{tpu_custom_call.1} parent=95 // pred_check_branch
          %366 = sbr.rel (%p364) target = $region100
        $region99: #{tpu_custom_call.1} parent=95 // pred_region
          %s367 = sand.u32 %s104, 1
          %s368 = sand.u32 %s104, 1
          %s369 = smul.addr %s368, 16
          %s370 = scalar_lea.vmem [#allocation6], %s369
        $region100: #{tpu_custom_call.1} parent=95 // pred_fallthru
          _
      $region96: #{tpu_custom_call.1} parent=5 // pred_fallthru
        _
    $region6: #{tpu_custom_call.1} parent=1 // loop_footer
      %s20 = sadd.s32 1, %s16
    $region7: #{tpu_custom_call.1} parent=1 // loop_footer_branch
      %15 = sbr.rel target = $region3
    $region8: #{tpu_custom_call.1} parent=1 // loop_exit
      _
    %371 = vsyncpa [#allocation5], 1
    %s372 = scalar_lea.sflag [#allocation5], 1
    %373 = vsyncpa %s372, 1

</llo_original>
